<compile_context>
chip_gen: v5e
topology: v5e:2x2
jax: 0.10.0
libtpu: 0.0.40
codegen_flags: <defaults>
</compile_context>

<pallas_src>
import jax
import jax.numpy as jnp
from jax import lax
from jax.experimental import pallas as pl
from jax.experimental.pallas import tpu as pltpu


_VMEM_LIMIT = 32 * 1024 * 1024  # safe on v5e/v6e/v7x; working sets here are far smaller


def _round_up(x, m):
    return (x + m - 1) // m * m


def _pad2(a, rows, cols):
    return jnp.pad(a, ((0, rows - a.shape[0]), (0, cols - a.shape[1])))


def _largest_tile(n, cap):
    """Largest multiple of 128 that divides `n` (a multiple of 128) and is <= cap."""
    cap = max(128, min(cap, n))
    t = cap // 128 * 128
    while t >= 128:
        if n % t == 0:
            return t
        t -= 128
    return 128


# ----------------------------- Pallas kernels ------------------------------ #
def _encode_rows_kernel(x_ref, ae_w0_ref, ae_b0_ref, ae_w1_ref, ae_b1_ref,
                        ge_w0_ref, az_ref, p0_ref):
    """Per-row-block: A_z = MLP(x) (fp32);  P0 = x @ ge_w0 stored as bf16."""
    x = x_ref[...]
    h = jnp.dot(x, ae_w0_ref[...], preferred_element_type=jnp.float32) + ae_b0_ref[...]
    h = jnp.maximum(h, 0.0)
    az_ref[...] = jnp.dot(h, ae_w1_ref[...],
                          preferred_element_type=jnp.float32) + ae_b1_ref[...]
    p0_ref[...] = jnp.dot(x, ge_w0_ref[...],
                          preferred_element_type=jnp.float32).astype(p0_ref.dtype)


def _gcn_layer1_kernel(ahat_ref, p0_ref, ge_b0_ref, ge_w1_ref, p1_ref, acc_ref):
    """H1 = relu(A_hat @ P0 + b0);  P1 = H1 @ ge_w1 (bf16).  k = contraction axis."""
    k = pl.program_id(1)

    @pl.when(k == 0)
    def _():
        acc_ref[...] = jnp.zeros_like(acc_ref)

    acc_ref[...] += jnp.dot(ahat_ref[...], p0_ref[...],
                            preferred_element_type=jnp.float32)

    @pl.when(k == pl.num_programs(1) - 1)
    def _():
        h1 = jnp.maximum(acc_ref[...] + ge_b0_ref[...], 0.0)
        p1_ref[...] = jnp.dot(h1, ge_w1_ref[...],
                              preferred_element_type=jnp.float32).astype(p1_ref.dtype)


def _gcn_layer2_decode_kernel(ahat_ref, p1_ref, ge_b1_ref, az_ref,
                              ad_w0_ref, ad_b0_ref, ad_w1_ref, ad_b1_ref,
                              sz_ref, arec_ref, acc_ref):
    """S_z = A_hat @ P1 + b1;  Z = A_z + S_z;  A_recon = decoder MLP(Z)."""
    k = pl.program_id(1)

    @pl.when(k == 0)
    def _():
        acc_ref[...] = jnp.zeros_like(acc_ref)

    acc_ref[...] += jnp.dot(ahat_ref[...], p1_ref[...],
                            preferred_element_type=jnp.float32)

    @pl.when(k == pl.num_programs(1) - 1)
    def _():
        s_z = acc_ref[...] + ge_b1_ref[...]
        sz_ref[...] = s_z
        z = az_ref[...] + s_z
        hd = jnp.dot(z, ad_w0_ref[...],
                     preferred_element_type=jnp.float32) + ad_b0_ref[...]
        hd = jnp.maximum(hd, 0.0)
        arec_ref[...] = jnp.dot(hd, ad_w1_ref[...],
                                preferred_element_type=jnp.float32) + ad_b1_ref[...]


def _inner_product_kernel(sz_row_ref, sz_col_ref, srec_ref):
    """S_recon[i,j] block = sigmoid(S_z[i-blk] @ S_z[j-blk].T).

    bf16 MXU path with fp32 accumulation, sigmoid via exp(-x) + approx EUP
    reciprocal, no XLU transpose (contract last dims with dot_general)."""
    a = sz_row_ref[...].astype(jnp.bfloat16)
    b = sz_col_ref[...].astype(jnp.bfloat16)
    adj = lax.dot_general(
        a, b,
        dimension_numbers=(((1,), (1,)), ((), ())),
        preferred_element_type=jnp.float32)
    sig = pl.reciprocal(1.0 + jnp.exp(-adj), approx=True)
    srec_ref[...] = sig.astype(srec_ref.dtype)


# ------------------------------ JAX wrapper -------------------------------- #
def svdae_forward(features, a_hat, params, *, srecon_dtype=jnp.bfloat16):
    """features: [N, F] f32, a_hat: [N, N] f32 (normalized dense adjacency).

    Returns (A_z, S_z, A_recon, S_recon).  S_recon is emitted in `srecon_dtype`
    (bf16 by default to halve the N^2 writeback; pass jnp.float32 for exact
    dtype parity with the PyTorch module)."""
    N, F = features.shape
    H = params["ae_w0"].shape[1]
    C = params["ae_w1"].shape[1]

    # Lane-dense, MXU-friendly padded sizes (N only padded to 128).
    Np = _round_up(max(N, 128), 128)
    Fp = _round_up(F, 128)
    Hp = _round_up(H, 128)
    Cp = _round_up(C, 128)

    # Row tile <= 512, clamped so the "parallel" row axis has >= 2 blocks when
    # possible (v7x megacore); contraction tile <= 1024; stage-4 col tile <= 512.
    row_cap = min(512, max(128, (Np // 2) // 128 * 128))
    tm = _largest_tile(Np, row_cap)
    tk = _largest_tile(Np, 1024)
    tn = _largest_tile(Np, 512)
    n_row, n_k, n_col = Np // tm, Np // tk, Np // tn

    # Zero-pad inputs / parameters (zero padding is exact for all outputs).
    x_p = _pad2(features, Np, Fp)
    a_bf = _pad2(a_hat, Np, Np).astype(jnp.bfloat16)   # dominant N^2 stream -> bf16
    pp = {
        "ae_w0": _pad2(params["ae_w0"], Fp, Hp), "ae_b0": _pad2(params["ae_b0"], 1, Hp),
        "ae_w1": _pad2(params["ae_w1"], Hp, Cp), "ae_b1": _pad2(params["ae_b1"], 1, Cp),
        "ge_w0": _pad2(params["ge_w0"], Fp, Hp), "ge_b0": _pad2(params["ge_b0"], 1, Hp),
        "ge_w1": _pad2(params["ge_w1"], Hp, Cp), "ge_b1": _pad2(params["ge_b1"], 1, Cp),
        "ad_w0": _pad2(params["ad_w0"], Cp, Hp), "ad_b0": _pad2(params["ad_b0"], 1, Hp),
        "ad_w1": _pad2(params["ad_w1"], Hp, Fp), "ad_b1": _pad2(params["ad_b1"], 1, Fp),
    }

    def full(shape):  # VMEM-resident across the grid (constant block index)
        return pl.BlockSpec(shape, lambda *_: (0, 0))

    cp_rows = pltpu.CompilerParams(
        dimension_semantics=("parallel",), vmem_limit_bytes=_VMEM_LIMIT)
    cp_agg = pltpu.CompilerParams(
        dimension_semantics=("parallel", "arbitrary"), vmem_limit_bytes=_VMEM_LIMIT)
    cp_outer = pltpu.CompilerParams(
        dimension_semantics=("parallel", "parallel"), vmem_limit_bytes=_VMEM_LIMIT)

    srec_bytes = Np * Np * (2 if srecon_dtype == jnp.bfloat16 else 4)

    # ---- Stage 1: A_z (f32) and P0 = X @ ge_w0 (bf16), row-tiled --------------
    az_p, p0_p = pl.pallas_call(
        _encode_rows_kernel,
        out_shape=(jax.ShapeDtypeStruct((Np, Cp), jnp.float32),
                   jax.ShapeDtypeStruct((Np, Hp), jnp.bfloat16)),
        grid=(n_row,),
        in_specs=[
            pl.BlockSpec((tm, Fp), lambda i: (i, 0)),
            full((Fp, Hp)), full((1, Hp)), full((Hp, Cp)), full((1, Cp)),
            full((Fp, Hp)),
        ],
        out_specs=(pl.BlockSpec((tm, Cp), lambda i: (i, 0)),
                   pl.BlockSpec((tm, Hp), lambda i: (i, 0))),
        compiler_params=cp_rows,
        cost_estimate=pl.CostEstimate(
            flops=4 * Np * Fp * Hp + 2 * Np * Hp * Cp,
            transcendentals=0,
            bytes_accessed=4 * (Np * Fp + Np * Cp + 2 * Fp * Hp + Hp * Cp + Hp + Cp)
                           + 2 * Np * Hp),
    )(x_p, pp["ae_w0"], pp["ae_b0"], pp["ae_w1"], pp["ae_b1"], pp["ge_w0"])

    # ---- Stage 2: GCN layer 1 aggregation + projection ------------------------
    p1_p = pl.pallas_call(
        _gcn_layer1_kernel,
        out_shape=jax.ShapeDtypeStruct((Np, Cp), jnp.bfloat16),
        grid=(n_row, n_k),
        in_specs=[
            pl.BlockSpec((tm, tk), lambda i, k: (i, k)),   # A_hat row slab (bf16)
            pl.BlockSpec((tk, Hp), lambda i, k: (k, 0)),   # P0 contraction blk (bf16)
            full((1, Hp)), full((Hp, Cp)),
        ],
        out_specs=pl.BlockSpec((tm, Cp), lambda i, k: (i, 0)),
        scratch_shapes=[pltpu.VMEM((tm, Hp), jnp.float32)],
        compiler_params=cp_agg,
        cost_estimate=pl.CostEstimate(
            flops=2 * Np * Np * Hp + 2 * Np * Hp * Cp,
            transcendentals=0,
            bytes_accessed=2 * Np * Np + 2 * Np * Hp * n_row + 2 * Np * Cp
                           + 4 * (Hp * Cp + Hp)),
    )(a_bf, p0_p, pp["ge_b0"], pp["ge_w1"])

    # ---- Stage 3: GCN layer 2 aggregation, Z = A_z + S_z, decoder MLP ---------
    sz_p, arec_p = pl.pallas_call(
        _gcn_layer2_decode_kernel,
        out_shape=(jax.ShapeDtypeStruct((Np, Cp), jnp.float32),
                   jax.ShapeDtypeStruct((Np, Fp), jnp.float32)),
        grid=(n_row, n_k),
        in_specs=[
            pl.BlockSpec((tm, tk), lambda i, k: (i, k)),   # A_hat row slab (bf16)
            pl.BlockSpec((tk, Cp), lambda i, k: (k, 0)),   # P1 contraction blk (bf16)
            full((1, Cp)),
            pl.BlockSpec((tm, Cp), lambda i, k: (i, 0)),   # A_z row block (f32)
            full((Cp, Hp)), full((1, Hp)), full((Hp, Fp)), full((1, Fp)),
        ],
        out_specs=(pl.BlockSpec((tm, Cp), lambda i, k: (i, 0)),
                   pl.BlockSpec((tm, Fp), lambda i, k: (i, 0))),
        scratch_shapes=[pltpu.VMEM((tm, Cp), jnp.float32)],
        compiler_params=cp_agg,
        cost_estimate=pl.CostEstimate(
            flops=2 * Np * Np * Cp + 2 * Np * Cp * Hp + 2 * Np * Hp * Fp,
            transcendentals=0,
            bytes_accessed=2 * Np * Np + 2 * Np * Cp * n_row
                           + 4 * (2 * Np * Cp + Np * Fp)
                           + 4 * (Cp * Hp + Hp * Fp + Cp + Hp + Fp)),
    )(a_bf, p1_p, pp["ge_b1"], az_p,
      pp["ad_w0"], pp["ad_b0"], pp["ad_w1"], pp["ad_b1"])

    # ---- Stage 4: S_recon = sigmoid(S_z @ S_z.T), (i, j) tiled, bf16 out ------
    # TODO(synk): exploit symmetry (i <= j triangular grid + mirror) for a
    # further ~2x on MXU/EUP/HBM-write; skipped here for plumbing simplicity.
    srec_p = pl.pallas_call(
        _inner_product_kernel,
        out_shape=jax.ShapeDtypeStruct((Np, Np), srecon_dtype),
        grid=(n_row, n_col),
        in_specs=[
            pl.BlockSpec((tm, Cp), lambda i, j: (i, 0)),
            pl.BlockSpec((tn, Cp), lambda i, j: (j, 0)),
        ],
        out_specs=pl.BlockSpec((tm, tn), lambda i, j: (i, j)),
        compiler_params=cp_outer,
        cost_estimate=pl.CostEstimate(
            flops=2 * Np * Np * Cp,
            transcendentals=2 * Np * Np,
            bytes_accessed=4 * 2 * Np * Cp + srec_bytes),
    )(sz_p, sz_p)

    # Slice back to logical (unpadded) shapes.
    return (az_p[:N, :C], sz_p[:N, :C], arec_p[:N, :F], srec_p[:N, :N])


# -------------------------- deterministic params --------------------------- #
def init_params(key, in_feats, n_hidden, n_classes):
    ks = jax.random.split(key, 12)

    def lin(k, fan_in, fan_out):
        lim = 1.0 / jnp.sqrt(jnp.float32(fan_in))
        return jax.random.uniform(k, (fan_in, fan_out), jnp.float32, -lim, lim)

    def bias(k, fan_in, fan_out):
        lim = 1.0 / jnp.sqrt(jnp.float32(fan_in))
        return jax.random.uniform(k, (1, fan_out), jnp.float32, -lim, lim)

    return {
        # A_encoder MLP: in_feats -> n_hidden -> n_classes
        "ae_w0": lin(ks[0], in_feats, n_hidden),  "ae_b0": bias(ks[1], in_feats, n_hidden),
        "ae_w1": lin(ks[2], n_hidden, n_classes), "ae_b1": bias(ks[3], n_hidden, n_classes),
        # S_encoder GCN: in_feats -> n_hidden -> n_classes
        "ge_w0": lin(ks[4], in_feats, n_hidden),  "ge_b0": bias(ks[5], in_feats, n_hidden),
        "ge_w1": lin(ks[6], n_hidden, n_classes), "ge_b1": bias(ks[7], n_hidden, n_classes),
        # A_decoder MLP: n_classes -> n_hidden -> in_feats
        "ad_w0": lin(ks[8], n_classes, n_hidden), "ad_b0": bias(ks[9], n_classes, n_hidden),
        "ad_w1": lin(ks[10], n_hidden, in_feats), "ad_b1": bias(ks[11], n_hidden, in_feats),
    }


def build_normalized_adjacency(key, n_nodes):
    """Random symmetric graph with self loops, D^-1/2 (A + I) D^-1/2."""
    a = (jax.random.uniform(key, (n_nodes, n_nodes)) > 0.7).astype(jnp.float32)
    a = jnp.maximum(a, a.T)
    a = a + jnp.eye(n_nodes, dtype=jnp.float32)
    deg = jnp.sum(a, axis=1)
    d_inv_sqrt = 1.0 / jnp.sqrt(deg)
    return a * d_inv_sqrt[:, None] * d_inv_sqrt[None, :]


# pure-JAX reference for sanity check
def svdae_ref(features, a_hat, p):
    relu = lambda v: jnp.maximum(v, 0.0)
    h = relu(features @ p["ae_w0"] + p["ae_b0"])
    a_z = h @ p["ae_w1"] + p["ae_b1"]
    hg = relu(a_hat @ (features @ p["ge_w0"]) + p["ge_b0"])
    s_z = a_hat @ (hg @ p["ge_w1"]) + p["ge_b1"]
    z = a_z + s_z
    hd = relu(z @ p["ad_w0"] + p["ad_b0"])
    a_recon = hd @ p["ad_w1"] + p["ad_b1"]
    s_recon = jax.nn.sigmoid(s_z @ s_z.T)
    return a_z, s_z, a_recon, s_recon


if __name__ == "__main__":
    # Small shapes consistent with the module: N nodes, in_feats features.
    N, IN_FEATS, N_HIDDEN, N_CLASSES = 200, 48, 64, 16

    root = jax.random.PRNGKey(0)
    k_feat, k_adj, k_par = jax.random.split(root, 3)

    features = jax.random.normal(k_feat, (N, IN_FEATS), jnp.float32)
    a_hat = build_normalized_adjacency(k_adj, N)
    params = init_params(k_par, IN_FEATS, N_HIDDEN, N_CLASSES)

    a_z, s_z, a_recon, s_recon = jax.block_until_ready(
        svdae_forward(features, a_hat, params))

    r_az, r_sz, r_arec, r_srec = svdae_ref(features, a_hat, params)

    assert a_z.shape == r_az.shape and s_z.shape == r_sz.shape
    assert a_recon.shape == r_arec.shape and s_recon.shape == r_srec.shape

    # A_z path is pure fp32 -> tight tolerance.
    assert jnp.allclose(a_z, r_az, atol=1e-4, rtol=1e-4)
    # S_z / A_recon / S_recon stream A_hat and GCN activations as bf16
    # (fp32 accumulation), and S_recon is emitted in bf16 -> looser tolerance.
    assert jnp.allclose(s_z, r_sz, atol=5e-2, rtol=5e-2)
    assert jnp.allclose(a_recon, r_arec, atol=5e-2, rtol=5e-2)
    assert jnp.allclose(s_recon.astype(jnp.float32), r_srec, atol=5e-2, rtol=5e-2)

    print("KERNEL_OK")
</pallas_src>

<mosaic_0001>
module attributes {stable_mosaic.version = 11 : i64} {
  func.func @_encode_rows_kernel(%arg0: i32, %arg1: memref<128x128xf32, #tpu.memory_space<vmem>>, %arg2: memref<128x128xf32, #tpu.memory_space<vmem>>, %arg3: memref<1x128xf32, #tpu.memory_space<vmem>>, %arg4: memref<128x128xf32, #tpu.memory_space<vmem>>, %arg5: memref<1x128xf32, #tpu.memory_space<vmem>>, %arg6: memref<128x128xf32, #tpu.memory_space<vmem>>, %arg7: memref<128x128xf32, #tpu.memory_space<vmem>>, %arg8: memref<128x128xbf16, #tpu.memory_space<vmem>>) attributes {dimension_semantics = [#tpu.dimension_semantics<parallel>], iteration_bounds = array<i64: 2>, scalar_prefetch = 0 : i64, scratch_operands = 0 : i64, tpu.core_type = #tpu.core_type<tc>, window_params = [{transform_indices = @transform_0, window_bounds = array<i64: 128, 128>}, {pipeline_mode = #tpu.pipeline_mode<synchronous>, transform_indices = @transform_1, window_bounds = array<i64: 128, 128>}, {pipeline_mode = #tpu.pipeline_mode<synchronous>, transform_indices = @transform_2, window_bounds = array<i64: 1, 128>}, {pipeline_mode = #tpu.pipeline_mode<synchronous>, transform_indices = @transform_3, window_bounds = array<i64: 128, 128>}, {pipeline_mode = #tpu.pipeline_mode<synchronous>, transform_indices = @transform_4, window_bounds = array<i64: 1, 128>}, {pipeline_mode = #tpu.pipeline_mode<synchronous>, transform_indices = @transform_5, window_bounds = array<i64: 128, 128>}, {transform_indices = @transform_6, window_bounds = array<i64: 128, 128>}, {transform_indices = @transform_7, window_bounds = array<i64: 128, 128>}]} {
    %c0 = arith.constant 0 : index
    %c0_0 = arith.constant 0 : index
    %0 = vector.load %arg1[%c0, %c0_0] : memref<128x128xf32, #tpu.memory_space<vmem>>, vector<128x128xf32>
    %c0_1 = arith.constant 0 : index
    %c0_2 = arith.constant 0 : index
    %1 = vector.load %arg2[%c0_1, %c0_2] : memref<128x128xf32, #tpu.memory_space<vmem>>, vector<128x128xf32>
    %cst = arith.constant dense<0.000000e+00> : vector<128x128xf32>
    %2 = tpu.matmul %0, %1, %cst {dimension_numbers = #tpu.dot_dimension_numbers<[1], [0], [0], [1], [0, 0, 1, 1], [], []>} : vector<128x128xf32>, vector<128x128xf32>, vector<128x128xf32> -> vector<128x128xf32>
    %c0_3 = arith.constant 0 : index
    %c0_4 = arith.constant 0 : index
    %3 = vector.load %arg3[%c0_3, %c0_4] : memref<1x128xf32, #tpu.memory_space<vmem>>, vector<1x128xf32>
    %4 = vector.broadcast %3 : vector<1x128xf32> to vector<128x128xf32>
    %5 = arith.addf %2, %4 : vector<128x128xf32>
    %cst_5 = arith.constant 0.000000e+00 : f32
    %6 = vector.broadcast %cst_5 : f32 to vector<128x128xf32>
    %7 = arith.maximumf %5, %6 : vector<128x128xf32>
    %c0_6 = arith.constant 0 : index
    %c0_7 = arith.constant 0 : index
    %8 = vector.load %arg4[%c0_6, %c0_7] : memref<128x128xf32, #tpu.memory_space<vmem>>, vector<128x128xf32>
    %cst_8 = arith.constant dense<0.000000e+00> : vector<128x128xf32>
    %9 = tpu.matmul %7, %8, %cst_8 {dimension_numbers = #tpu.dot_dimension_numbers<[1], [0], [0], [1], [0, 0, 1, 1], [], []>} : vector<128x128xf32>, vector<128x128xf32>, vector<128x128xf32> -> vector<128x128xf32>
    %c0_9 = arith.constant 0 : index
    %c0_10 = arith.constant 0 : index
    %10 = vector.load %arg5[%c0_9, %c0_10] : memref<1x128xf32, #tpu.memory_space<vmem>>, vector<1x128xf32>
    %11 = vector.broadcast %10 : vector<1x128xf32> to vector<128x128xf32>
    %12 = arith.addf %9, %11 : vector<128x128xf32>
    %c0_11 = arith.constant 0 : index
    %c0_12 = arith.constant 0 : index
    %13 = vector.load %arg7[%c0_11, %c0_12] : memref<128x128xf32, #tpu.memory_space<vmem>>, vector<128x128xf32>
    tpu.vector_store %arg7[%c0_11, %c0_12], %12 {strides = array<i32>} : memref<128x128xf32, #tpu.memory_space<vmem>>, vector<128x128xf32>,
    %c0_13 = arith.constant 0 : index
    %c0_14 = arith.constant 0 : index
    %14 = vector.load %arg6[%c0_13, %c0_14] : memref<128x128xf32, #tpu.memory_space<vmem>>, vector<128x128xf32>
    %cst_15 = arith.constant dense<0.000000e+00> : vector<128x128xf32>
    %15 = tpu.matmul %0, %14, %cst_15 {dimension_numbers = #tpu.dot_dimension_numbers<[1], [0], [0], [1], [0, 0, 1, 1], [], []>} : vector<128x128xf32>, vector<128x128xf32>, vector<128x128xf32> -> vector<128x128xf32>
    %16 = arith.truncf %15 : vector<128x128xf32> to vector<128x128xbf16>
    %c0_16 = arith.constant 0 : index
    %c0_17 = arith.constant 0 : index
    %17 = vector.load %arg8[%c0_16, %c0_17] : memref<128x128xbf16, #tpu.memory_space<vmem>>, vector<128x128xbf16>
    tpu.vector_store %arg8[%c0_16, %c0_17], %16 {strides = array<i32>} : memref<128x128xbf16, #tpu.memory_space<vmem>>, vector<128x128xbf16>,
    return
  }
  func.func @transform_0(%arg0: i32) -> (i32, i32) {
    %c0_i32 = arith.constant 0 : i32
    %c0_i32_0 = arith.constant 0 : i32
    return %arg0, %c0_i32 : i32, i32
  }
  func.func @transform_1(%arg0: i32) -> (i32, i32) {
    %c0_i32 = arith.constant 0 : i32
    %c0_i32_0 = arith.constant 0 : i32
    %c0_i32_1 = arith.constant 0 : i32
    return %c0_i32, %c0_i32_0 : i32, i32
  }
  func.func @transform_2(%arg0: i32) -> (i32, i32) {
    %c0_i32 = arith.constant 0 : i32
    %c0_i32_0 = arith.constant 0 : i32
    %c0_i32_1 = arith.constant 0 : i32
    return %c0_i32, %c0_i32_0 : i32, i32
  }
  func.func @transform_3(%arg0: i32) -> (i32, i32) {
    %c0_i32 = arith.constant 0 : i32
    %c0_i32_0 = arith.constant 0 : i32
    %c0_i32_1 = arith.constant 0 : i32
    return %c0_i32, %c0_i32_0 : i32, i32
  }
  func.func @transform_4(%arg0: i32) -> (i32, i32) {
    %c0_i32 = arith.constant 0 : i32
    %c0_i32_0 = arith.constant 0 : i32
    %c0_i32_1 = arith.constant 0 : i32
    return %c0_i32, %c0_i32_0 : i32, i32
  }
  func.func @transform_5(%arg0: i32) -> (i32, i32) {
    %c0_i32 = arith.constant 0 : i32
    %c0_i32_0 = arith.constant 0 : i32
    %c0_i32_1 = arith.constant 0 : i32
    return %c0_i32, %c0_i32_0 : i32, i32
  }
  func.func @transform_6(%arg0: i32) -> (i32, i32) {
    %c0_i32 = arith.constant 0 : i32
    %c0_i32_0 = arith.constant 0 : i32
    return %arg0, %c0_i32 : i32, i32
  }
  func.func @transform_7(%arg0: i32) -> (i32, i32) {
    %c0_i32 = arith.constant 0 : i32
    %c0_i32_0 = arith.constant 0 : i32
    return %arg0, %c0_i32 : i32, i32
  }
}

</mosaic_0001>

<llo_original>
// kernel: tpu_custom_call.1
$region0: #{tpu_custom_call.1}
  #allocation0 [shape = 'u32[]', space=smem, size = 0x4, offset = 0x4, fixed_abs, tag = 'smem constant byte address 0x4 - core index']
  #allocation1 [shape = 'u32[72,128]{1,0:T(1,128)}', space=vmem, size = 0x9000, scoped, tag = 'internal scratch']
  %s0 = inlined_call_operand.hbm [shape: f32[256,128], index: 0, kind: input, shape index: {}]
  %s1 = inlined_call_operand.hbm [shape: f32[128,128], index: 1, kind: input, shape index: {}]
  %s2 = inlined_call_operand.vmem [shape: f32[1,128], index: 2, kind: input, shape index: {}]
  %s3 = inlined_call_operand.hbm [shape: f32[128,128], index: 3, kind: input, shape index: {}]
  %s4 = inlined_call_operand.vmem [shape: f32[1,128], index: 4, kind: input, shape index: {}]
  %s5 = inlined_call_operand.hbm [shape: f32[128,128], index: 5, kind: input, shape index: {}]
  %s6 = inlined_call_operand.hbm [shape: f32[256,128], index: 6, kind: output, shape index: {0}]
  %s7 = inlined_call_operand.hbm [shape: bf16[256,128], index: 7, kind: output, shape index: {1}]
  %8 = xla_tuple %s6, %s7
  %s9 = sld [smem:[#allocation0]]
  $region81: #{tpu_custom_call.1} parent=0
    _
  %s11 = ssub.s32 1, %s9
  %s12 = scalar_select 0, %s11, %s9
  $region1: #{tpu_custom_call.1} parent=0
    #allocation2 [shape = 'u8[131072]{0}', space=vmem, size = 0x20000, scoped, tag = 'input window, operand 0']
    #allocation3 [shape = 's32[2]{0}', space=sflag, size = 0x8, scoped, tag = 'scoped memory for tpu_custom_call.1']
    #allocation4 [shape = 's32[2]{0}', space=sflag, size = 0x8, scoped, tag = 'scoped memory for tpu_custom_call.1']
    #allocation5 [shape = 'u8[65536]{0}', space=vmem, size = 0x10000, scoped, tag = 'input window, operand 1, single buffered']
    #allocation6 [shape = 's32[1]{0}', space=sflag, size = 0x4, scoped, tag = 'scoped memory for tpu_custom_call.1']
    #allocation7 [shape = 'u8[65536]{0}', space=vmem, size = 0x10000, scoped, tag = 'input window, operand 3, single buffered']
    #allocation8 [shape = 'u8[65536]{0}', space=vmem, size = 0x10000, scoped, tag = 'input window, operand 5, single buffered']
    #allocation9 [shape = 's32[1]{0}', space=sflag, size = 0x4, scoped, tag = 'scoped memory for tpu_custom_call.1']
    #allocation10 [shape = 'u8[131072]{0}', space=vmem, size = 0x20000, scoped, tag = 'output window, operand 0']
    #allocation11 [shape = 'u8[65536]{0}', space=vmem, size = 0x10000, scoped, tag = 'output window, operand 1']
    #allocation12 [shape = 's32[2]{0}', space=sflag, size = 0x8, scoped, tag = 'scoped memory for tpu_custom_call.1']
    %13 = vsyncpa [#allocation3], 0
    %s14 = scalar_lea.sflag [#allocation3], 1
    %15 = vsyncpa %s14, 0
    %16 = vsyncpa [#allocation6], 0
    %17 = vsyncpa [#allocation9], 0
    %18 = vsyncpa [#allocation4], 0
    %s19 = scalar_lea.sflag [#allocation4], 1
    %20 = vsyncpa %s19, 0
    %21 = vsyncpa [#allocation12], 0
    %s22 = scalar_lea.sflag [#allocation12], 1
    %23 = vsyncpa %s22, 0
    loop: start=0, step=1, limit=4
    $region2: #{tpu_custom_call.1} parent=1 // loop_pre_header
      _
    $region3: #{tpu_custom_call.1} parent=1 // loop_header
      %s25 = sphi 0, %s29
      %p26 = scmp.ge.s32.totalorder %s25, 4
      %s35 = sphi 0, %s37
      %s38 = sphi 0, %s35
      %s39 = sphi 0, %s38
      %s55 = sphi 0, %s39
      %s59 = sphi 0, %s59
      %s61 = sphi 0, %s59
      %s62 = sphi 0, %s61
      %s76 = sphi 0, %s62
      %s80 = sphi 0, %s80
      %s82 = sphi 0, %s80
      %s83 = sphi 0, %s82
      %s97 = sphi 0, %s83
      %s101 = sphi 0, %s101
      %s103 = sphi 0, %s101
      %s104 = sphi 0, %s103
      %s118 = sphi 0, %s104
      %s122 = sphi 0, %s122
      %s124 = sphi 0, %s122
      %s125 = sphi 0, %s124
      %s139 = sphi 0, %s125
      %s143 = sphi 0, %s143
      %s145 = sphi 0, %s143
      %s146 = sphi 0, %s145
      %s160 = sphi 0, %s146
      %s166 = sphi 0, %s168
      %s169 = sphi 0, %s166
      %s170 = sphi 0, %s169
      %s186 = sphi 0, %s170
      %s192 = sphi 0, %s194
      %s195 = sphi 0, %s192
      %s196 = sphi 0, %s195
      %s212 = sphi 0, %s196
    $region4: #{tpu_custom_call.1} parent=1 // loop_header_branch
      %28 = sbr.rel (%p26) target = $region8
    $region5: #{tpu_custom_call.1} parent=1 // loop_body
      %s30 = ssub.s32 %s25, 1
      %s31 = ssub.s32 %s25, 2
      %s32 = sadd.s32 %s25, 1
      %s33 = ssub.s32 %s25, %s32
      %p34 = scmp.eq.s32.totalorder %s33, 0
      %s36 = sadd.s32 %s35, 1
      %s37 = scalar_select %p34, %s35, %s36
      %p40 = pneg %p34
      %p41 = scmp.eq.s32.totalorder %s25, 1
      %p42 = por %p40, %p41
      %p43 = scmp.ne.s32.totalorder %s35, %s38
      %p44 = scmp.eq.s32.totalorder %s25, 0
      %p45 = por %p43, %p44
      %p46 = scmp.ne.s32.totalorder %s35, %s38
      %p47 = scmp.eq.s32.totalorder %s30, 1
      %p48 = por %p46, %p47
      %p49 = scmp.ne.s32.totalorder %s38, %s39
      %p50 = scmp.eq.s32.totalorder %s30, 0
      %p51 = por %p49, %p50
      %p52 = scmp.ne.s32.totalorder %s38, %s39
      %p53 = scmp.eq.s32.totalorder %s31, 1
      %p54 = por %p52, %p53
      %p56 = scmp.ne.s32.totalorder %s39, %s55
      %p57 = scmp.eq.s32.totalorder %s31, 0
      %p58 = por %p56, %p57
      %s60 = sadd.s32 %s59, 1
      %p63 = scmp.eq.s32.totalorder %s25, 1
      %p64 = scmp.ne.s32.totalorder %s59, %s61
      %p65 = scmp.eq.s32.totalorder %s25, 0
      %p66 = por %p64, %p65
      %p67 = scmp.ne.s32.totalorder %s59, %s61
      %p68 = scmp.eq.s32.totalorder %s30, 1
      %p69 = por %p67, %p68
      %p70 = scmp.ne.s32.totalorder %s61, %s62
      %p71 = scmp.eq.s32.totalorder %s30, 0
      %p72 = por %p70, %p71
      %p73 = scmp.ne.s32.totalorder %s61, %s62
      %p74 = scmp.eq.s32.totalorder %s31, 1
      %p75 = por %p73, %p74
      %p77 = scmp.ne.s32.totalorder %s62, %s76
      %p78 = scmp.eq.s32.totalorder %s31, 0
      %p79 = por %p77, %p78
      %s81 = sadd.s32 %s80, 1
      %p84 = scmp.eq.s32.totalorder %s25, 1
      %p85 = scmp.ne.s32.totalorder %s80, %s82
      %p86 = scmp.eq.s32.totalorder %s25, 0
      %p87 = por %p85, %p86
      %p88 = scmp.ne.s32.totalorder %s80, %s82
      %p89 = scmp.eq.s32.totalorder %s30, 1
      %p90 = por %p88, %p89
      %p91 = scmp.ne.s32.totalorder %s82, %s83
      %p92 = scmp.eq.s32.totalorder %s30, 0
      %p93 = por %p91, %p92
      %p94 = scmp.ne.s32.totalorder %s82, %s83
      %p95 = scmp.eq.s32.totalorder %s31, 1
      %p96 = por %p94, %p95
      %p98 = scmp.ne.s32.totalorder %s83, %s97
      %p99 = scmp.eq.s32.totalorder %s31, 0
      %p100 = por %p98, %p99
      %s102 = sadd.s32 %s101, 1
      %p105 = scmp.eq.s32.totalorder %s25, 1
      %p106 = scmp.ne.s32.totalorder %s101, %s103
      %p107 = scmp.eq.s32.totalorder %s25, 0
      %p108 = por %p106, %p107
      %p109 = scmp.ne.s32.totalorder %s101, %s103
      %p110 = scmp.eq.s32.totalorder %s30, 1
      %p111 = por %p109, %p110
      %p112 = scmp.ne.s32.totalorder %s103, %s104
      %p113 = scmp.eq.s32.totalorder %s30, 0
      %p114 = por %p112, %p113
      %p115 = scmp.ne.s32.totalorder %s103, %s104
      %p116 = scmp.eq.s32.totalorder %s31, 1
      %p117 = por %p115, %p116
      %p119 = scmp.ne.s32.totalorder %s104, %s118
      %p120 = scmp.eq.s32.totalorder %s31, 0
      %p121 = por %p119, %p120
      %s123 = sadd.s32 %s122, 1
      %p126 = scmp.eq.s32.totalorder %s25, 1
      %p127 = scmp.ne.s32.totalorder %s122, %s124
      %p128 = scmp.eq.s32.totalorder %s25, 0
      %p129 = por %p127, %p128
      %p130 = scmp.ne.s32.totalorder %s122, %s124
      %p131 = scmp.eq.s32.totalorder %s30, 1
      %p132 = por %p130, %p131
      %p133 = scmp.ne.s32.totalorder %s124, %s125
      %p134 = scmp.eq.s32.totalorder %s30, 0
      %p135 = por %p133, %p134
      %p136 = scmp.ne.s32.totalorder %s124, %s125
      %p137 = scmp.eq.s32.totalorder %s31, 1
      %p138 = por %p136, %p137
      %p140 = scmp.ne.s32.totalorder %s125, %s139
      %p141 = scmp.eq.s32.totalorder %s31, 0
      %p142 = por %p140, %p141
      %s144 = sadd.s32 %s143, 1
      %p147 = scmp.eq.s32.totalorder %s25, 1
      %p148 = scmp.ne.s32.totalorder %s143, %s145
      %p149 = scmp.eq.s32.totalorder %s25, 0
      %p150 = por %p148, %p149
      %p151 = scmp.ne.s32.totalorder %s143, %s145
      %p152 = scmp.eq.s32.totalorder %s30, 1
      %p153 = por %p151, %p152
      %p154 = scmp.ne.s32.totalorder %s145, %s146
      %p155 = scmp.eq.s32.totalorder %s30, 0
      %p156 = por %p154, %p155
      %p157 = scmp.ne.s32.totalorder %s145, %s146
      %p158 = scmp.eq.s32.totalorder %s31, 1
      %p159 = por %p157, %p158
      %p161 = scmp.ne.s32.totalorder %s146, %s160
      %p162 = scmp.eq.s32.totalorder %s31, 0
      %p163 = por %p161, %p162
      %s164 = ssub.s32 %s25, %s32
      %p165 = scmp.eq.s32.totalorder %s164, 0
      %s167 = sadd.s32 %s166, 1
      %s168 = scalar_select %p165, %s166, %s167
      %p171 = pneg %p165
      %p172 = scmp.eq.s32.totalorder %s25, 1
      %p173 = por %p171, %p172
      %p174 = scmp.ne.s32.totalorder %s166, %s169
      %p175 = scmp.eq.s32.totalorder %s25, 0
      %p176 = por %p174, %p175
      %p177 = scmp.ne.s32.totalorder %s166, %s169
      %p178 = scmp.eq.s32.totalorder %s30, 1
      %p179 = por %p177, %p178
      %p180 = scmp.ne.s32.totalorder %s169, %s170
      %p181 = scmp.eq.s32.totalorder %s30, 0
      %p182 = por %p180, %p181
      %p183 = scmp.ne.s32.totalorder %s169, %s170
      %p184 = scmp.eq.s32.totalorder %s31, 1
      %p185 = por %p183, %p184
      %p187 = scmp.ne.s32.totalorder %s170, %s186
      %p188 = scmp.eq.s32.totalorder %s31, 0
      %p189 = por %p187, %p188
      %s190 = ssub.s32 %s25, %s32
      %p191 = scmp.eq.s32.totalorder %s190, 0
      %s193 = sadd.s32 %s192, 1
      %s194 = scalar_select %p191, %s192, %s193
      %p197 = pneg %p191
      %p198 = scmp.eq.s32.totalorder %s25, 1
      %p199 = por %p197, %p198
      %p200 = scmp.ne.s32.totalorder %s192, %s195
      %p201 = scmp.eq.s32.totalorder %s25, 0
      %p202 = por %p200, %p201
      %p203 = scmp.ne.s32.totalorder %s192, %s195
      %p204 = scmp.eq.s32.totalorder %s30, 1
      %p205 = por %p203, %p204
      %p206 = scmp.ne.s32.totalorder %s195, %s196
      %p207 = scmp.eq.s32.totalorder %s30, 0
      %p208 = por %p206, %p207
      %p209 = scmp.ne.s32.totalorder %s195, %s196
      %p210 = scmp.eq.s32.totalorder %s31, 1
      %p211 = por %p209, %p210
      %p213 = scmp.ne.s32.totalorder %s196, %s212
      %p214 = scmp.eq.s32.totalorder %s31, 0
      %p215 = por %p213, %p214
      %p216 = scmp.le.s32.totalorder 1, %s25
      %p217 = scmp.lt.s32.totalorder %s25, 3
      %p218 = pnand %p216, %p217
      %p219 = pneg %p218
      // Predicated region
      $region9: #{tpu_custom_call.1} parent=5 // pred_check
        _
      $region10: #{tpu_custom_call.1} parent=5 // pred_check_branch
        %221 = sbr.rel (%p218) target = $region12
      $region11: #{tpu_custom_call.1} parent=5 // pred_region
        %s222 = ssub.s32 %s25, 1
        // Predicated region
        $region13: #{tpu_custom_call.1} parent=11 // pred_check
          %p223 = pneg %p72
        $region14: #{tpu_custom_call.1} parent=11 // pred_check_branch
          %225 = sbr.rel (%p223) target = $region16
        $region15: #{tpu_custom_call.1} parent=11 // pred_region
          %227 = vsyncadd [#allocation6], 0
          %s228 = sshll.u32 %s1, 4
          %s229 = int_to_ptr.hbm [resolvable:$true] %s228
          %s230 = sshll.u32 [#allocation5], 4
          %s231 = int_to_ptr.vmem [resolvable:$true] %s230
          %236 = dma.hbm_to_vmem [thread:$0]  %s229, 2048, %s231, [#allocation6], 128, 128, 8
        $region16: #{tpu_custom_call.1} parent=11 // pred_fallthru
          _
        // Predicated region
        $region17: #{tpu_custom_call.1} parent=11 // pred_check
          %p237 = pneg %p93
        $region18: #{tpu_custom_call.1} parent=11 // pred_check_branch
          %239 = sbr.rel (%p237) target = $region20
        $region19: #{tpu_custom_call.1} parent=11 // pred_region
          _
        $region20: #{tpu_custom_call.1} parent=11 // pred_fallthru
          _
        // Predicated region
        $region21: #{tpu_custom_call.1} parent=11 // pred_check
          %p240 = pneg %p114
        $region22: #{tpu_custom_call.1} parent=11 // pred_check_branch
          %242 = sbr.rel (%p240) target = $region24
        $region23: #{tpu_custom_call.1} parent=11 // pred_region
          %244 = vsyncadd [#allocation6], 0
          %s245 = sshll.u32 %s3, 4
          %s246 = int_to_ptr.hbm [resolvable:$true] %s245
          %s247 = sshll.u32 [#allocation7], 4
          %s248 = int_to_ptr.vmem [resolvable:$true] %s247
          %253 = dma.hbm_to_vmem [thread:$0]  %s246, 2048, %s248, [#allocation6], 128, 128, 8
        $region24: #{tpu_custom_call.1} parent=11 // pred_fallthru
          _
        // Predicated region
        $region25: #{tpu_custom_call.1} parent=11 // pred_check
          %p254 = pneg %p135
        $region26: #{tpu_custom_call.1} parent=11 // pred_check_branch
          %256 = sbr.rel (%p254) target = $region28
        $region27: #{tpu_custom_call.1} parent=11 // pred_region
          _
        $region28: #{tpu_custom_call.1} parent=11 // pred_fallthru
          _
        // Predicated region
        $region29: #{tpu_custom_call.1} parent=11 // pred_check
          %p257 = pneg %p156
        $region30: #{tpu_custom_call.1} parent=11 // pred_check_branch
          %259 = sbr.rel (%p257) target = $region32
        $region31: #{tpu_custom_call.1} parent=11 // pred_region
          %261 = vsyncadd [#allocation9], 0
          %s262 = sshll.u32 %s5, 4
          %s263 = int_to_ptr.hbm [resolvable:$true] %s262
          %s264 = sshll.u32 [#allocation8], 4
          %s265 = int_to_ptr.vmem [resolvable:$true] %s264
          %270 = dma.hbm_to_vmem [thread:$0]  %s263, 2048, %s265, [#allocation9], 128, 128, 8
        $region32: #{tpu_custom_call.1} parent=11 // pred_fallthru
          _
      $region12: #{tpu_custom_call.1} parent=5 // pred_fallthru
        _
      %p271 = scmp.lt.s32.totalorder %s25, 2
      // Predicated region
      $region33: #{tpu_custom_call.1} parent=5 // pred_check
        %p272 = pneg %p271
      $region34: #{tpu_custom_call.1} parent=5 // pred_check_branch
        %274 = sbr.rel (%p272) target = $region36
      $region35: #{tpu_custom_call.1} parent=5 // pred_region
        // Predicated region
        $region37: #{tpu_custom_call.1} parent=35 // pred_check
          %p275 = pneg %p45
        $region38: #{tpu_custom_call.1} parent=35 // pred_check_branch
          %277 = sbr.rel (%p275) target = $region40
        $region39: #{tpu_custom_call.1} parent=35 // pred_region
          %s278 = sand.u32 %s35, 1
          %s279 = scalar_lea.sflag [#allocation3], %s278
          %s280 = sand.u32 %s35, 1
          %s281 = smul.addr %s280, 128
          %s282 = scalar_lea.vmem [#allocation2], %s281
          %s283 = smul.u32 16, %s25
          %285 = vsyncadd %s279, 0
          %s286 = smul.addr %s283, 8
          %s287 = scalar_lea.hbm %s0, %s286
          %s288 = sshll.u32 %s287, 4
          %s289 = int_to_ptr.hbm [resolvable:$true] %s288
          %s290 = sshll.u32 %s282, 4
          %s291 = int_to_ptr.vmem [resolvable:$true] %s290
          %296 = dma.hbm_to_vmem [thread:$0]  %s289, 2048, %s291, %s279, 128, 128, 8
        $region40: #{tpu_custom_call.1} parent=35 // pred_fallthru
          _
      $region36: #{tpu_custom_call.1} parent=5 // pred_fallthru
        _
      %p297 = scmp.le.s32.totalorder 1, %s25
      %p298 = scmp.lt.s32.totalorder %s25, 3
      %p299 = pnand %p297, %p298
      %p300 = pneg %p299
      // Predicated region
      $region41: #{tpu_custom_call.1} parent=5 // pred_check
        _
      $region42: #{tpu_custom_call.1} parent=5 // pred_check_branch
        %302 = sbr.rel (%p299) target = $region44
      $region43: #{tpu_custom_call.1} parent=5 // pred_region
        %s303 = ssub.s32 %s25, 1
        %s304 = sand.u32 %s38, 1
        %s305 = scalar_lea.sflag [#allocation3], %s304
        %s306 = sand.u32 %s38, 1
        %s307 = smul.addr %s306, 128
        %s308 = scalar_lea.vmem [#allocation2], %s307
        // Predicated region
        $region45: #{tpu_custom_call.1} parent=43 // pred_check
          %p309 = pneg %p51
        $region46: #{tpu_custom_call.1} parent=43 // pred_check_branch
          %311 = sbr.rel (%p309) target = $region48
        $region47: #{tpu_custom_call.1} parent=43 // pred_region
          %313 = dma.done %s305, 2048
        $region48: #{tpu_custom_call.1} parent=43 // pred_fallthru
          _
        // Predicated region
        $region49: #{tpu_custom_call.1} parent=43 // pred_check
          %p314 = pneg %p72
        $region50: #{tpu_custom_call.1} parent=43 // pred_check_branch
          %316 = sbr.rel (%p314) target = $region52
        $region51: #{tpu_custom_call.1} parent=43 // pred_region
          %318 = dma.done [#allocation6], 2048
        $region52: #{tpu_custom_call.1} parent=43 // pred_fallthru
          _
        // Predicated region
        $region53: #{tpu_custom_call.1} parent=43 // pred_check
          %p319 = pneg %p114
        $region54: #{tpu_custom_call.1} parent=43 // pred_check_branch
          %321 = sbr.rel (%p319) target = $region56
        $region55: #{tpu_custom_call.1} parent=43 // pred_region
          %323 = dma.done [#allocation6], 2048
        $region56: #{tpu_custom_call.1} parent=43 // pred_fallthru
          _
        // Predicated region
        $region57: #{tpu_custom_call.1} parent=43 // pred_check
          %p324 = pneg %p156
        $region58: #{tpu_custom_call.1} parent=43 // pred_check_branch
          %326 = sbr.rel (%p324) target = $region60
        $region59: #{tpu_custom_call.1} parent=43 // pred_region
          %328 = dma.done [#allocation9], 2048
        $region60: #{tpu_custom_call.1} parent=43 // pred_fallthru
          _
        %s329 = sand.u32 %s38, 1
        %s330 = scalar_lea.sflag [#allocation3], %s329
        %s331 = sand.u32 %s38, 1
        %s332 = smul.addr %s331, 128
        %s333 = scalar_lea.vmem [#allocation2], %s332
        %p334 = pneg %p51
        %p335 = pneg %p48
        %p336 = pneg %p72
        %p337 = pneg %p69
        %p338 = pneg %p93
        %p339 = pneg %p90
        %p340 = pneg %p114
        %p341 = pneg %p111
        %p342 = pneg %p135
        %p343 = pneg %p132
        %p344 = pneg %p156
        %p345 = pneg %p153
        %p346 = pneg %p182
        %p347 = pneg %p179
        %s348 = sand.u32 %s169, 1
        %s349 = scalar_lea.sflag [#allocation4], %s348
        %s350 = sand.u32 %s169, 1
        %s351 = smul.addr %s350, 128
        %s352 = scalar_lea.vmem [#allocation10], %s351
        %p353 = pneg %p208
        %p354 = pneg %p205
        %s355 = sand.u32 %s195, 1
        %s356 = scalar_lea.sflag [#allocation12], %s355
        %s357 = sand.u32 %s195, 1
        %s358 = smul.addr %s357, 64
        %s359 = scalar_lea.vmem [#allocation11], %s358
        %s360 = smul.u32 16, %s30
        %s361 = smul.u32 16, %s30
        %s362 = smul.u32 16, %s30
        %v363 = vld [vmem:[%s308] sm:$0xff]
        %v364 = vld [vmem:[%s308 + $0x8] sm:$0xff]
        %v365 = vld [vmem:[%s308 + $0x10] sm:$0xff]
        %v366 = vld [vmem:[%s308 + $0x18] sm:$0xff]
        %v367 = vld [vmem:[%s308 + $0x20] sm:$0xff]
        %v368 = vld [vmem:[%s308 + $0x28] sm:$0xff]
        %v369 = vld [vmem:[%s308 + $0x30] sm:$0xff]
        %v370 = vld [vmem:[%s308 + $0x38] sm:$0xff]
        %v371 = vld [vmem:[%s308 + $0x40] sm:$0xff]
        %v372 = vld [vmem:[%s308 + $0x48] sm:$0xff]
        %v373 = vld [vmem:[%s308 + $0x50] sm:$0xff]
        %v374 = vld [vmem:[%s308 + $0x58] sm:$0xff]
        %v375 = vld [vmem:[%s308 + $0x60] sm:$0xff]
        %v376 = vld [vmem:[%s308 + $0x68] sm:$0xff]
        %v377 = vld [vmem:[%s308 + $0x70] sm:$0xff]
        %v378 = vld [vmem:[%s308 + $0x78] sm:$0xff]
        %v379 = vld [vmem:[#allocation5] sm:$0xff]
        %v380 = vld [vmem:[#allocation5 + $0x8] sm:$0xff]
        %v381 = vld [vmem:[#allocation5 + $0x10] sm:$0xff]
        %v382 = vld [vmem:[#allocation5 + $0x18] sm:$0xff]
        %v383 = vld [vmem:[#allocation5 + $0x20] sm:$0xff]
        %v384 = vld [vmem:[#allocation5 + $0x28] sm:$0xff]
        %v385 = vld [vmem:[#allocation5 + $0x30] sm:$0xff]
        %v386 = vld [vmem:[#allocation5 + $0x38] sm:$0xff]
        %v387 = vld [vmem:[#allocation5 + $0x40] sm:$0xff]
        %v388 = vld [vmem:[#allocation5 + $0x48] sm:$0xff]
        %v389 = vld [vmem:[#allocation5 + $0x50] sm:$0xff]
        %v390 = vld [vmem:[#allocation5 + $0x58] sm:$0xff]
        %v391 = vld [vmem:[#allocation5 + $0x60] sm:$0xff]
        %v392 = vld [vmem:[#allocation5 + $0x68] sm:$0xff]
        %v393 = vld [vmem:[#allocation5 + $0x70] sm:$0xff]
        %v394 = vld [vmem:[#allocation5 + $0x78] sm:$0xff]
        %v395 = vld [vmem:[%s2] sm:$0x1]
        %v397 = vperm.slane %v395, 0
        %399 = vmatpush.msra.mxu0 %v394
        %400 = vmatpush.msra.mxu0 %v393
        %401 = vmatpush.msra.mxu0 %v392
        %402 = vmatpush.msra.mxu0 %v391
        %403 = vmatpush.msra.mxu0 %v390
        %404 = vmatpush.msra.mxu0 %v389
        %405 = vmatpush.msra.mxu0 %v388
        %406 = vmatpush.msra.mxu0 %v387
        %407 = vmatpush.msra.mxu0 %v386
        %408 = vmatpush.msra.mxu0 %v385
        %409 = vmatpush.msra.mxu0 %v384
        %410 = vmatpush.msra.mxu0 %v383
        %411 = vmatpush.msra.mxu0 %v382
        %412 = vmatpush.msra.mxu0 %v381
        %413 = vmatpush.msra.mxu0 %v380
        %414 = vmatpush.msra.mxu0 %v379
        %415 = vmatmul.f32.gmra.mxu0 %v363
        %v416 = vpop.f32.mrf.mxu0
        %v417 = vadd.f32 %v397, %v416
        %418 = vmatmul.f32.gmra.mxu0 %v364
        %v419 = vpop.f32.mrf.mxu0
        %v420 = vadd.f32 %v397, %v419
        %421 = vmatmul.f32.gmra.mxu0 %v365
        %v422 = vpop.f32.mrf.mxu0
        %v423 = vadd.f32 %v397, %v422
        %424 = vmatmul.f32.gmra.mxu0 %v366
        %v425 = vpop.f32.mrf.mxu0
        %v426 = vadd.f32 %v397, %v425
        %427 = vmatmul.f32.gmra.mxu0 %v367
        %v428 = vpop.f32.mrf.mxu0
        %v429 = vadd.f32 %v397, %v428
        %430 = vmatmul.f32.gmra.mxu0 %v368
        %v431 = vpop.f32.mrf.mxu0
        %v432 = vadd.f32 %v397, %v431
        %433 = vmatmul.f32.gmra.mxu0 %v369
        %v434 = vpop.f32.mrf.mxu0
        %v435 = vadd.f32 %v397, %v434
        %436 = vmatmul.f32.gmra.mxu0 %v370
        %v437 = vpop.f32.mrf.mxu0
        %v438 = vadd.f32 %v397, %v437
        %439 = vmatmul.f32.gmra.mxu0 %v371
        %v440 = vpop.f32.mrf.mxu0
        %v441 = vadd.f32 %v397, %v440
        %442 = vmatmul.f32.gmra.mxu0 %v372
        %v443 = vpop.f32.mrf.mxu0
        %v444 = vadd.f32 %v397, %v443
        %445 = vmatmul.f32.gmra.mxu0 %v373
        %v446 = vpop.f32.mrf.mxu0
        %v447 = vadd.f32 %v397, %v446
        %448 = vmatmul.f32.gmra.mxu0 %v374
        %v449 = vpop.f32.mrf.mxu0
        %v450 = vadd.f32 %v397, %v449
        %451 = vmatmul.f32.gmra.mxu0 %v375
        %v452 = vpop.f32.mrf.mxu0
        %v453 = vadd.f32 %v397, %v452
        %454 = vmatmul.f32.gmra.mxu0 %v376
        %v455 = vpop.f32.mrf.mxu0
        %v456 = vadd.f32 %v397, %v455
        %457 = vmatmul.f32.gmra.mxu0 %v377
        %v458 = vpop.f32.mrf.mxu0
        %v459 = vadd.f32 %v397, %v458
        %460 = vmatmul.f32.gmra.mxu0 %v378
        %v461 = vpop.f32.mrf.mxu0
        %v462 = vadd.f32 %v397, %v461
        %463 = vdwg.mxu0
        %v464 = vmax.f32 %v417, 0.0
        %v465 = vmax.f32 %v420, 0.0
        %v466 = vmax.f32 %v423, 0.0
        %v467 = vmax.f32 %v426, 0.0
        %v468 = vmax.f32 %v429, 0.0
        %v469 = vmax.f32 %v432, 0.0
        %v470 = vmax.f32 %v435, 0.0
        %v471 = vmax.f32 %v438, 0.0
        %v472 = vmax.f32 %v441, 0.0
        %v473 = vmax.f32 %v444, 0.0
        %v474 = vmax.f32 %v447, 0.0
        %v475 = vmax.f32 %v450, 0.0
        %v476 = vmax.f32 %v453, 0.0
        %v477 = vmax.f32 %v456, 0.0
        %v478 = vmax.f32 %v459, 0.0
        %v479 = vmax.f32 %v462, 0.0
        %v480 = vld [vmem:[#allocation7] sm:$0xff]
        %v481 = vld [vmem:[#allocation7 + $0x8] sm:$0xff]
        %v482 = vld [vmem:[#allocation7 + $0x10] sm:$0xff]
        %v483 = vld [vmem:[#allocation7 + $0x18] sm:$0xff]
        %v484 = vld [vmem:[#allocation7 + $0x20] sm:$0xff]
        %v485 = vld [vmem:[#allocation7 + $0x28] sm:$0xff]
        %v486 = vld [vmem:[#allocation7 + $0x30] sm:$0xff]
        %v487 = vld [vmem:[#allocation7 + $0x38] sm:$0xff]
        %v488 = vld [vmem:[#allocation7 + $0x40] sm:$0xff]
        %v489 = vld [vmem:[#allocation7 + $0x48] sm:$0xff]
        %v490 = vld [vmem:[#allocation7 + $0x50] sm:$0xff]
        %v491 = vld [vmem:[#allocation7 + $0x58] sm:$0xff]
        %v492 = vld [vmem:[#allocation7 + $0x60] sm:$0xff]
        %v493 = vld [vmem:[#allocation7 + $0x68] sm:$0xff]
        %v494 = vld [vmem:[#allocation7 + $0x70] sm:$0xff]
        %v495 = vld [vmem:[#allocation7 + $0x78] sm:$0xff]
        %v496 = vld [vmem:[%s4] sm:$0x1]
        %v498 = vperm.slane %v496, 0
        %500 = vmatpush.msra.mxu0 %v495
        %501 = vmatpush.msra.mxu0 %v494
        %502 = vmatpush.msra.mxu0 %v493
        %503 = vmatpush.msra.mxu0 %v492
        %504 = vmatpush.msra.mxu0 %v491
        %505 = vmatpush.msra.mxu0 %v490
        %506 = vmatpush.msra.mxu0 %v489
        %507 = vmatpush.msra.mxu0 %v488
        %508 = vmatpush.msra.mxu0 %v487
        %509 = vmatpush.msra.mxu0 %v486
        %510 = vmatpush.msra.mxu0 %v485
        %511 = vmatpush.msra.mxu0 %v484
        %512 = vmatpush.msra.mxu0 %v483
        %513 = vmatpush.msra.mxu0 %v482
        %514 = vmatpush.msra.mxu0 %v481
        %515 = vmatpush.msra.mxu0 %v480
        %516 = vmatmul.f32.gmra.mxu0 %v464
        %v517 = vpop.f32.mrf.mxu0
        %v518 = vadd.f32 %v498, %v517
        %519 = vmatmul.f32.gmra.mxu0 %v465
        %v520 = vpop.f32.mrf.mxu0
        %v521 = vadd.f32 %v498, %v520
        %522 = vmatmul.f32.gmra.mxu0 %v466
        %v523 = vpop.f32.mrf.mxu0
        %v524 = vadd.f32 %v498, %v523
        %525 = vmatmul.f32.gmra.mxu0 %v467
        %v526 = vpop.f32.mrf.mxu0
        %v527 = vadd.f32 %v498, %v526
        %528 = vmatmul.f32.gmra.mxu0 %v468
        %v529 = vpop.f32.mrf.mxu0
        %v530 = vadd.f32 %v498, %v529
        %531 = vmatmul.f32.gmra.mxu0 %v469
        %v532 = vpop.f32.mrf.mxu0
        %v533 = vadd.f32 %v498, %v532
        %534 = vmatmul.f32.gmra.mxu0 %v470
        %v535 = vpop.f32.mrf.mxu0
        %v536 = vadd.f32 %v498, %v535
        %537 = vmatmul.f32.gmra.mxu0 %v471
        %v538 = vpop.f32.mrf.mxu0
        %v539 = vadd.f32 %v498, %v538
        %540 = vmatmul.f32.gmra.mxu0 %v472
        %v541 = vpop.f32.mrf.mxu0
        %v542 = vadd.f32 %v498, %v541
        %543 = vmatmul.f32.gmra.mxu0 %v473
        %v544 = vpop.f32.mrf.mxu0
        %v545 = vadd.f32 %v498, %v544
        %546 = vmatmul.f32.gmra.mxu0 %v474
        %v547 = vpop.f32.mrf.mxu0
        %v548 = vadd.f32 %v498, %v547
        %549 = vmatmul.f32.gmra.mxu0 %v475
        %v550 = vpop.f32.mrf.mxu0
        %v551 = vadd.f32 %v498, %v550
        %552 = vmatmul.f32.gmra.mxu0 %v476
        %v553 = vpop.f32.mrf.mxu0
        %v554 = vadd.f32 %v498, %v553
        %555 = vmatmul.f32.gmra.mxu0 %v477
        %v556 = vpop.f32.mrf.mxu0
        %v557 = vadd.f32 %v498, %v556
        %558 = vmatmul.f32.gmra.mxu0 %v478
        %v559 = vpop.f32.mrf.mxu0
        %v560 = vadd.f32 %v498, %v559
        %561 = vmatmul.f32.gmra.mxu0 %v479
        %v562 = vpop.f32.mrf.mxu0
        %v563 = vadd.f32 %v498, %v562
        %564 = vdwg.mxu0
        %565 = vst [vmem:[%s352] sm:$0xff] %v518
        %566 = vst [vmem:[%s352 + $0x8] sm:$0xff] %v521
        %567 = vst [vmem:[%s352 + $0x10] sm:$0xff] %v524
        %568 = vst [vmem:[%s352 + $0x18] sm:$0xff] %v527
        %569 = vst [vmem:[%s352 + $0x20] sm:$0xff] %v530
        %570 = vst [vmem:[%s352 + $0x28] sm:$0xff] %v533
        %571 = vst [vmem:[%s352 + $0x30] sm:$0xff] %v536
        %572 = vst [vmem:[%s352 + $0x38] sm:$0xff] %v539
        %573 = vst [vmem:[%s352 + $0x40] sm:$0xff] %v542
        %574 = vst [vmem:[%s352 + $0x48] sm:$0xff] %v545
        %575 = vst [vmem:[%s352 + $0x50] sm:$0xff] %v548
        %576 = vst [vmem:[%s352 + $0x58] sm:$0xff] %v551
        %577 = vst [vmem:[%s352 + $0x60] sm:$0xff] %v554
        %578 = vst [vmem:[%s352 + $0x68] sm:$0xff] %v557
        %579 = vst [vmem:[%s352 + $0x70] sm:$0xff] %v560
        %580 = vst [vmem:[%s352 + $0x78] sm:$0xff] %v563
        %v581 = vld [vmem:[#allocation8] sm:$0xff]
        %v582 = vld [vmem:[#allocation8 + $0x8] sm:$0xff]
        %v583 = vld [vmem:[#allocation8 + $0x10] sm:$0xff]
        %v584 = vld [vmem:[#allocation8 + $0x18] sm:$0xff]
        %v585 = vld [vmem:[#allocation8 + $0x20] sm:$0xff]
        %v586 = vld [vmem:[#allocation8 + $0x28] sm:$0xff]
        %v587 = vld [vmem:[#allocation8 + $0x30] sm:$0xff]
        %v588 = vld [vmem:[#allocation8 + $0x38] sm:$0xff]
        %v589 = vld [vmem:[#allocation8 + $0x40] sm:$0xff]
        %v590 = vld [vmem:[#allocation8 + $0x48] sm:$0xff]
        %v591 = vld [vmem:[#allocation8 + $0x50] sm:$0xff]
        %v592 = vld [vmem:[#allocation8 + $0x58] sm:$0xff]
        %v593 = vld [vmem:[#allocation8 + $0x60] sm:$0xff]
        %v594 = vld [vmem:[#allocation8 + $0x68] sm:$0xff]
        %v595 = vld [vmem:[#allocation8 + $0x70] sm:$0xff]
        %v596 = vld [vmem:[#allocation8 + $0x78] sm:$0xff]
        %597 = vmatpush.msra.mxu0 %v596
        %598 = vmatpush.msra.mxu0 %v595
        %599 = vmatpush.msra.mxu0 %v594
        %600 = vmatpush.msra.mxu0 %v593
        %601 = vmatpush.msra.mxu0 %v592
        %602 = vmatpush.msra.mxu0 %v591
        %603 = vmatpush.msra.mxu0 %v590
        %604 = vmatpush.msra.mxu0 %v589
        %605 = vmatpush.msra.mxu0 %v588
        %606 = vmatpush.msra.mxu0 %v587
        %607 = vmatpush.msra.mxu0 %v586
        %608 = vmatpush.msra.mxu0 %v585
        %609 = vmatpush.msra.mxu0 %v584
        %610 = vmatpush.msra.mxu0 %v583
        %611 = vmatpush.msra.mxu0 %v582
        %612 = vmatpush.msra.mxu0 %v581
        %613 = vmatmul.f32.gmra.mxu0 %v363
        %v614 = vpop.f32.mrf.mxu0
        %v615 = vadd.f32 0.0, %v614
        %616 = vmatmul.f32.gmra.mxu0 %v364
        %v617 = vpop.f32.mrf.mxu0
        %v618 = vadd.f32 0.0, %v617
        %619 = vmatmul.f32.gmra.mxu0 %v365
        %v620 = vpop.f32.mrf.mxu0
        %v621 = vadd.f32 0.0, %v620
        %622 = vmatmul.f32.gmra.mxu0 %v366
        %v623 = vpop.f32.mrf.mxu0
        %v624 = vadd.f32 0.0, %v623
        %625 = vmatmul.f32.gmra.mxu0 %v367
        %v626 = vpop.f32.mrf.mxu0
        %v627 = vadd.f32 0.0, %v626
        %628 = vmatmul.f32.gmra.mxu0 %v368
        %v629 = vpop.f32.mrf.mxu0
        %v630 = vadd.f32 0.0, %v629
        %631 = vmatmul.f32.gmra.mxu0 %v369
        %v632 = vpop.f32.mrf.mxu0
        %v633 = vadd.f32 0.0, %v632
        %634 = vmatmul.f32.gmra.mxu0 %v370
        %v635 = vpop.f32.mrf.mxu0
        %v636 = vadd.f32 0.0, %v635
        %637 = vmatmul.f32.gmra.mxu0 %v371
        %v638 = vpop.f32.mrf.mxu0
        %v639 = vadd.f32 0.0, %v638
        %640 = vmatmul.f32.gmra.mxu0 %v372
        %v641 = vpop.f32.mrf.mxu0
        %v642 = vadd.f32 0.0, %v641
        %643 = vmatmul.f32.gmra.mxu0 %v373
        %v644 = vpop.f32.mrf.mxu0
        %v645 = vadd.f32 0.0, %v644
        %646 = vmatmul.f32.gmra.mxu0 %v374
        %v647 = vpop.f32.mrf.mxu0
        %v648 = vadd.f32 0.0, %v647
        %649 = vmatmul.f32.gmra.mxu0 %v375
        %v650 = vpop.f32.mrf.mxu0
        %v651 = vadd.f32 0.0, %v650
        %652 = vmatmul.f32.gmra.mxu0 %v376
        %v653 = vpop.f32.mrf.mxu0
        %v654 = vadd.f32 0.0, %v653
        %655 = vmatmul.f32.gmra.mxu0 %v377
        %v656 = vpop.f32.mrf.mxu0
        %v657 = vadd.f32 0.0, %v656
        %658 = vmatmul.f32.gmra.mxu0 %v378
        %v659 = vpop.f32.mrf.mxu0
        %v660 = vadd.f32 0.0, %v659
        %661 = vdwg.mxu0
        %v662 = vpack.c.bf16 %v615, %v615
        %v663 = vpack.c.bf16 %v618, %v618
        %v664 = vpack.c.bf16 %v621, %v621
        %v665 = vpack.c.bf16 %v624, %v624
        %v666 = vpack.c.bf16 %v627, %v627
        %v667 = vpack.c.bf16 %v630, %v630
        %v668 = vpack.c.bf16 %v633, %v633
        %v669 = vpack.c.bf16 %v636, %v636
        %v670 = vpack.c.bf16 %v639, %v639
        %v671 = vpack.c.bf16 %v642, %v642
        %v672 = vpack.c.bf16 %v645, %v645
        %v673 = vpack.c.bf16 %v648, %v648
        %v674 = vpack.c.bf16 %v651, %v651
        %v675 = vpack.c.bf16 %v654, %v654
        %v676 = vpack.c.bf16 %v657, %v657
        %v677 = vpack.c.bf16 %v660, %v660
        %678 = vst [vmem:[%s359] sm:$0xf] %v662
        %679 = vst [vmem:[%s359 + $0x4] sm:$0xf] %v663
        %680 = vst [vmem:[%s359 + $0x8] sm:$0xf] %v664
        %681 = vst [vmem:[%s359 + $0xc] sm:$0xf] %v665
        %682 = vst [vmem:[%s359 + $0x10] sm:$0xf] %v666
        %683 = vst [vmem:[%s359 + $0x14] sm:$0xf] %v667
        %684 = vst [vmem:[%s359 + $0x18] sm:$0xf] %v668
        %685 = vst [vmem:[%s359 + $0x1c] sm:$0xf] %v669
        %686 = vst [vmem:[%s359 + $0x20] sm:$0xf] %v670
        %687 = vst [vmem:[%s359 + $0x24] sm:$0xf] %v671
        %688 = vst [vmem:[%s359 + $0x28] sm:$0xf] %v672
        %689 = vst [vmem:[%s359 + $0x2c] sm:$0xf] %v673
        %690 = vst [vmem:[%s359 + $0x30] sm:$0xf] %v674
        %691 = vst [vmem:[%s359 + $0x34] sm:$0xf] %v675
        %692 = vst [vmem:[%s359 + $0x38] sm:$0xf] %v676
        %693 = vst [vmem:[%s359 + $0x3c] sm:$0xf] %v677
        %s694 = sand.u32 %s169, 1
        %s695 = scalar_lea.sflag [#allocation4], %s694
        %s696 = sand.u32 %s169, 1
        %s697 = smul.addr %s696, 128
        %s698 = scalar_lea.vmem [#allocation10], %s697
        %s699 = sand.u32 %s195, 1
        %s700 = scalar_lea.sflag [#allocation12], %s699
        %s701 = sand.u32 %s195, 1
        %s702 = smul.addr %s701, 64
        %s703 = scalar_lea.vmem [#allocation11], %s702
        // Predicated region
        $region61: #{tpu_custom_call.1} parent=43 // pred_check
          %p704 = pneg %p179
        $region62: #{tpu_custom_call.1} parent=43 // pred_check_branch
          %706 = sbr.rel (%p704) target = $region64
        $region63: #{tpu_custom_call.1} parent=43 // pred_region
          %s707 = smul.u32 16, %s30
          %709 = vsyncadd %s695, 0
          %s710 = smul.addr %s707, 8
          %s711 = scalar_lea.hbm %s6, %s710
          %s712 = sshll.u32 %s698, 4
          %s713 = int_to_ptr.vmem [resolvable:$true] %s712
          %s714 = sshll.u32 %s711, 4
          %s715 = int_to_ptr.hbm [resolvable:$true] %s714
          %720 = dma.vmem_to_hbm [thread:$0]  %s713, 2048, %s715, %s695, 128, 128, 8
        $region64: #{tpu_custom_call.1} parent=43 // pred_fallthru
          _
        // Predicated region
        $region65: #{tpu_custom_call.1} parent=43 // pred_check
          %p721 = pneg %p205
        $region66: #{tpu_custom_call.1} parent=43 // pred_check_branch
          %723 = sbr.rel (%p721) target = $region68
        $region67: #{tpu_custom_call.1} parent=43 // pred_region
          %s724 = smul.u32 16, %s30
          %726 = vsyncadd %s700, 0
          %s727 = smul.addr %s724, 4
          %s728 = scalar_lea.hbm %s7, %s727
          %s729 = sshll.u32 %s703, 4
          %s730 = int_to_ptr.vmem [resolvable:$true] %s729
          %s731 = sshll.u32 %s728, 4
          %s732 = int_to_ptr.hbm [resolvable:$true] %s731
          %737 = dma.vmem_to_hbm [thread:$0]  %s730, 1024, %s732, %s700, 64, 64, 4
        $region68: #{tpu_custom_call.1} parent=43 // pred_fallthru
          _
      $region44: #{tpu_custom_call.1} parent=5 // pred_fallthru
        _
      %p738 = scmp.le.s32.totalorder 2, %s25
      // Predicated region
      $region69: #{tpu_custom_call.1} parent=5 // pred_check
        %p739 = pneg %p738
      $region70: #{tpu_custom_call.1} parent=5 // pred_check_branch
        %741 = sbr.rel (%p739) target = $region72
      $region71: #{tpu_custom_call.1} parent=5 // pred_region
        %s742 = ssub.s32 %s25, 2
        // Predicated region
        $region73: #{tpu_custom_call.1} parent=71 // pred_check
          %p743 = pneg %p185
        $region74: #{tpu_custom_call.1} parent=71 // pred_check_branch
          %745 = sbr.rel (%p743) target = $region76
        $region75: #{tpu_custom_call.1} parent=71 // pred_region
          %s746 = sand.u32 %s170, 1
          %s747 = scalar_lea.sflag [#allocation4], %s746
          %s748 = sand.u32 %s170, 1
          %s749 = smul.addr %s748, 128
          %s750 = scalar_lea.vmem [#allocation10], %s749
          %752 = dma.done %s747, 2048
        $region76: #{tpu_custom_call.1} parent=71 // pred_fallthru
          _
        // Predicated region
        $region77: #{tpu_custom_call.1} parent=71 // pred_check
          %p753 = pneg %p211
        $region78: #{tpu_custom_call.1} parent=71 // pred_check_branch
          %755 = sbr.rel (%p753) target = $region80
        $region79: #{tpu_custom_call.1} parent=71 // pred_region
          %s756 = sand.u32 %s196, 1
          %s757 = scalar_lea.sflag [#allocation12], %s756
          %s758 = sand.u32 %s196, 1
          %s759 = smul.addr %s758, 64
          %s760 = scalar_lea.vmem [#allocation11], %s759
          %762 = dma.done %s757, 1024
        $region80: #{tpu_custom_call.1} parent=71 // pred_fallthru
          _
      $region72: #{tpu_custom_call.1} parent=5 // pred_fallthru
        _
    $region6: #{tpu_custom_call.1} parent=1 // loop_footer
      %s29 = sadd.s32 1, %s25
    $region7: #{tpu_custom_call.1} parent=1 // loop_footer_branch
      %24 = sbr.rel target = $region3
    $region8: #{tpu_custom_call.1} parent=1 // loop_exit
      _
    %763 = vsyncpa [#allocation3], 1
    %s764 = scalar_lea.sflag [#allocation3], 1
    %765 = vsyncpa %s764, 1
    %766 = vsyncpa [#allocation6], 1
    %767 = vsyncpa [#allocation9], 1
    %768 = vsyncpa [#allocation4], 1
    %s769 = scalar_lea.sflag [#allocation4], 1
    %770 = vsyncpa %s769, 1
    %771 = vsyncpa [#allocation12], 1
    %s772 = scalar_lea.sflag [#allocation12], 1
    %773 = vsyncpa %s772, 1

</llo_original>
